<compile_context>
chip_gen: v5e
topology: v5e:2x2
jax: 0.10.0
libtpu: 0.0.40
codegen_flags: <defaults>
</compile_context>

<pallas_src>
import functools
import inspect
import math

import jax
import jax.numpy as jnp
from jax.experimental import pallas as pl
from jax.experimental.pallas import tpu as pltpu

_MIB = 1024 * 1024


def _layernorm_kernel(x_ref, a_ref, b_ref, o_ref, *, eps, d_hid, n_fold):
    # x_ref / o_ref: (block_rows, n_fold * d_hid);  a_ref / b_ref: (1, d_hid).
    # Each kernel row holds n_fold independent logical rows of width d_hid.
    x = x_ref[...].astype(jnp.float32)
    a = a_ref[...].astype(jnp.float32)
    b = b_ref[...].astype(jnp.float32)
    inv_n = jnp.float32(1.0 / d_hid)
    nm1 = jnp.float32(d_hid - 1)  # d_hid == 1 -> 0 -> NaN, same as torch.std(ddof=1)
    eps32 = jnp.float32(eps)

    for s in range(n_fold):
        lo = s * d_hid
        xs = x if n_fold == 1 else x[:, lo:lo + d_hid]
        # Single-pass moments: both lane reductions issue while xs is in vregs.
        s1 = jnp.sum(xs, axis=-1, keepdims=True)
        s2 = jnp.sum(xs * xs, axis=-1, keepdims=True)
        mu = s1 * inv_n
        var = jnp.maximum(s2 - s1 * mu, jnp.float32(0.0)) / nm1  # unbiased (n-1)
        # Per-row reciprocal on the (block_rows, 1) sigma; exact (approx=False)
        # to hold the 1e-5-level tolerance.
        inv = pl.reciprocal(jnp.sqrt(var) + eps32, approx=False)
        # TODO(synk): bf16 epilogue (scale/shift in bf16) to halve the f32
        # temporaries under v7x's tighter VMEM when the I/O dtype is bf16.
        y = (xs - mu) * inv * a + b
        if n_fold == 1:
            o_ref[...] = y.astype(o_ref.dtype)
        else:
            o_ref[:, lo:lo + d_hid] = y.astype(o_ref.dtype)


def _round_up(x, m):
    return ((x + m - 1) // m) * m


def _tpu_vmem_capacity():
    """Physical VMEM per core; conservative (v7x-sized) fallback off-query."""
    try:
        return int(pltpu.get_tpu_info().vmem_capacity_bytes)
    except Exception:
        return 64 * _MIB


def _supports_pipeline_mode():
    if not hasattr(pl, "Buffered"):
        return False
    try:
        return "pipeline_mode" in inspect.signature(pl.BlockSpec).parameters
    except (TypeError, ValueError):
        return True  # cannot introspect; the call-site fallback handles failure


def _choose_block_rows(rows, width, itemsize, vmem_limit, in_buffers, capacity):
    """Row tile: VMEM-bounded, >= ~4 MiB HBM traffic per step, ~4 steps total,
    and an even >= 2 step count on 2-TensorCore (v7x-class) parts."""
    sub = max(8, 32 // itemsize)  # sublane packing: f32->8, bf16->16, i8->32
    if rows <= sub:
        return rows

    # Honest VMEM accounting: pipelined in/out blocks in the I/O dtype plus
    # ~3 full-width f32 temporaries (x, xs*xs, y) live inside the body.
    per_row = width * (itemsize * (in_buffers + 2) + 3 * 4)
    frac = 0.6 if capacity <= 64 * _MIB else 0.75  # tighter under v7x's 64 MiB VMEM
    vmem_rows = max(int(vmem_limit * frac) // per_row, sub)

    # Per-step byte floor: combined in+out HBM traffic >= ~4 MiB per grid step
    # keeps the ~0.35 us fixed step cost well under 10% even at 3.2 TB/s.
    floor_rows = _round_up(pl.cdiv(4 * _MIB, 2 * width * itemsize), sub)

    # Step-count target: ~4 steps (2 per TensorCore on v7x, plenty of depth for
    # the double/triple-buffered pipeline) -- never shrink below the floor.
    target_rows = _round_up(pl.cdiv(rows, 4), sub)

    block = min(vmem_rows, max(target_rows, floor_rows))
    block = max((block // sub) * sub, sub)

    # v7x-class proxy (2 TensorCores sharing HBM, 64 MiB VMEM): keep both cores
    # fed with an even number of >= 2 steps whenever there is enough work.
    two_core = capacity <= 64 * _MIB
    if two_core and rows >= 2 * sub:
        block = min(block, _round_up(pl.cdiv(rows, 2), sub))
        steps = pl.cdiv(rows, block)
        if steps % 2 == 1:
            for cand_steps in (steps + 1, steps + 3):  # best-effort evenness
                cand = max(_round_up(pl.cdiv(rows, cand_steps), sub), sub)
                if pl.cdiv(rows, cand) % 2 == 0:
                    block = cand
                    break

    return rows if block >= rows else block


def layer_normalization(z, a_2, b_2, eps=0.001, block_rows=None):
    """Pallas LayerNormalization matching the PyTorch module's forward."""
    if z.ndim >= 2 and z.shape[1] == 1:
        # Matches `if z.size(1) == 1: return z` (static shape -> Python check).
        return z

    orig_shape = z.shape
    d_hid = orig_shape[-1]
    rows = math.prod(orig_shape[:-1])

    # Lane folding: pack k consecutive logical rows into one 128-lane-dense
    # kernel row when d_hid evenly divides 128 (dense DMA + full vregs).
    n_fold = 1
    if 0 < d_hid < 128 and 128 % d_hid == 0:
        k = 128 // d_hid
        if k > 1 and rows % k == 0:
            n_fold = k
    width = n_fold * d_hid
    grid_rows = rows // n_fold

    x2 = z.reshape(grid_rows, width)
    a2 = a_2.reshape(1, d_hid)
    b2 = b_2.reshape(1, d_hid)

    itemsize = jnp.dtype(z.dtype).itemsize
    capacity = _tpu_vmem_capacity()
    vmem_limit = int(min(capacity // 2, 64 * _MIB))
    in_buffers = 3 if (capacity >= 96 * _MIB and _supports_pipeline_mode()) else 2

    if block_rows is None:
        block_rows = _choose_block_rows(
            grid_rows, width, itemsize, vmem_limit, in_buffers, capacity)

    kernel = functools.partial(
        _layernorm_kernel, eps=eps, d_hid=d_hid, n_fold=n_fold)

    param_bytes = 2 * d_hid * jnp.dtype(a_2.dtype).itemsize
    cost = pl.CostEstimate(
        flops=8 * rows * d_hid,
        transcendentals=rows,  # one sqrt + reciprocal per logical row
        bytes_accessed=2 * rows * d_hid * itemsize + param_bytes,
    )

    grid = (pl.cdiv(grid_rows, block_rows),)

    def run(n_in_buf):
        x_kwargs = {}
        if n_in_buf > 2:
            x_kwargs["pipeline_mode"] = pl.Buffered(n_in_buf)
        # No wrapper padding copy: cdiv grid; Pallas pads the partial last
        # block on read and masks the writeback (garbage rows are harmless
        # because every reduction is strictly per logical row).
        return pl.pallas_call(
            kernel,
            out_shape=jax.ShapeDtypeStruct((grid_rows, width), z.dtype),
            grid_spec=pltpu.PrefetchScalarGridSpec(
                num_scalar_prefetch=0,
                grid=grid,
                in_specs=[
                    pl.BlockSpec((block_rows, width), lambda i: (i, 0), **x_kwargs),
                    pl.BlockSpec((1, d_hid), lambda i: (0, 0)),
                    pl.BlockSpec((1, d_hid), lambda i: (0, 0)),
                ],
                out_specs=pl.BlockSpec((block_rows, width), lambda i: (i, 0)),
            ),
            compiler_params=pltpu.CompilerParams(
                dimension_semantics=("parallel",),
                vmem_limit_bytes=vmem_limit,
            ),
            cost_estimate=cost,
        )(x2, a2, b2)

    if in_buffers > 2:
        try:
            out = run(in_buffers)
        except Exception:  # pipeline_mode / Buffered not supported on this build
            out = run(2)
    else:
        out = run(2)

    return out.reshape(orig_shape)


def _reference(z, a_2, b_2, eps=0.001):
    if z.ndim >= 2 and z.shape[1] == 1:
        return z
    z32 = z.astype(jnp.float32)
    mu = jnp.mean(z32, axis=-1, keepdims=True)
    sigma = jnp.std(z32, axis=-1, keepdims=True, ddof=1)  # unbiased like torch.std
    out = (z32 - mu) / (sigma + eps)
    out = out * a_2 + b_2
    return out.astype(z.dtype)


if __name__ == "__main__":
    key = jax.random.PRNGKey(0)
    batch, seq, d_hid = 2, 8, 32

    z = jax.random.normal(key, (batch, seq, d_hid), dtype=jnp.float32)

    # Parameter init matching nn.Parameter(torch.ones/zeros(d_hid)).
    a_2 = jnp.ones((d_hid,), dtype=jnp.float32)
    b_2 = jnp.zeros((d_hid,), dtype=jnp.float32)

    # Tolerance is 2e-5: single-pass moments differ from the two-pass reference
    # only by f32 rounding (~1e-6 here), well inside this bound.
    out = jax.block_until_ready(layer_normalization(z, a_2, b_2, eps=0.001))
    ref = _reference(z, a_2, b_2, eps=0.001)
    assert out.shape == z.shape and out.dtype == z.dtype
    assert jnp.allclose(out, ref, atol=2e-5, rtol=2e-5), "mismatch vs reference"

    # Partial-last-block (masked writeback) path in the lane-folded regime:
    # 5*8=40 logical rows -> 10 folded rows of width 128, block_rows=8 -> grid 2.
    z3 = jax.random.normal(jax.random.PRNGKey(1), (5, 8, d_hid), dtype=jnp.float32)
    out3 = jax.block_until_ready(layer_normalization(z3, a_2, b_2, block_rows=8))
    assert jnp.allclose(out3, _reference(z3, a_2, b_2), atol=2e-5, rtol=2e-5), \
        "partial-block mismatch"

    # Unfolded path (d_hid already a multiple of 128) with nontrivial a_2/b_2.
    d2 = 128
    z4 = jax.random.normal(jax.random.PRNGKey(2), (2, 8, d2), dtype=jnp.float32)
    a4 = jnp.linspace(0.5, 1.5, d2).astype(jnp.float32)
    b4 = jnp.linspace(-0.2, 0.2, d2).astype(jnp.float32)
    out4 = jax.block_until_ready(layer_normalization(z4, a4, b4))
    assert jnp.allclose(out4, _reference(z4, a4, b4), atol=2e-5, rtol=2e-5), \
        "unfolded-path mismatch"

    # seq==1 passthrough branch.
    z1 = jax.random.normal(key, (batch, 1, d_hid), dtype=jnp.float32)
    out1 = jax.block_until_ready(layer_normalization(z1, a_2, b_2))
    assert jnp.array_equal(out1, z1)

    print("KERNEL_OK")
</pallas_src>

<mosaic_0001>
module attributes {stable_mosaic.version = 11 : i64} {
  func.func @_layernorm_kernel(%arg0: i32, %arg1: memref<4x128xf32, #tpu.memory_space<vmem>>, %arg2: memref<1x32xf32, #tpu.memory_space<vmem>>, %arg3: memref<1x32xf32, #tpu.memory_space<vmem>>, %arg4: memref<4x128xf32, #tpu.memory_space<vmem>>) attributes {dimension_semantics = [#tpu.dimension_semantics<parallel>], iteration_bounds = array<i64: 1>, scalar_prefetch = 0 : i64, scratch_operands = 0 : i64, tpu.core_type = #tpu.core_type<tc>, window_params = [{transform_indices = @transform_0, window_bounds = array<i64: 4, 128>}, {pipeline_mode = #tpu.pipeline_mode<synchronous>, transform_indices = @transform_1, window_bounds = array<i64: 1, 32>}, {pipeline_mode = #tpu.pipeline_mode<synchronous>, transform_indices = @transform_2, window_bounds = array<i64: 1, 32>}, {transform_indices = @transform_3, window_bounds = array<i64: 4, 128>}]} {
    %c0 = arith.constant 0 : index
    %c0_0 = arith.constant 0 : index
    %0 = vector.load %arg1[%c0, %c0_0] : memref<4x128xf32, #tpu.memory_space<vmem>>, vector<4x128xf32>
    %c0_1 = arith.constant 0 : index
    %c0_2 = arith.constant 0 : index
    %1 = vector.load %arg2[%c0_1, %c0_2] : memref<1x32xf32, #tpu.memory_space<vmem>>, vector<1x32xf32>
    %c0_3 = arith.constant 0 : index
    %c0_4 = arith.constant 0 : index
    %2 = vector.load %arg3[%c0_3, %c0_4] : memref<1x32xf32, #tpu.memory_space<vmem>>, vector<1x32xf32>
    %3 = vector.extract_strided_slice %0 {offsets = [0, 0], sizes = [4, 32], strides = [1, 1]} : vector<4x128xf32> to vector<4x32xf32>
    %cst = arith.constant dense<0.000000e+00> : vector<4xf32>
    %4 = vector.multi_reduction <add>, %3, %cst [1] : vector<4x32xf32> to vector<4xf32>
    %5 = vector.shape_cast %4 : vector<4xf32> to vector<4x1xf32>
    %6 = arith.mulf %3, %3 : vector<4x32xf32>
    %cst_5 = arith.constant dense<0.000000e+00> : vector<4xf32>
    %7 = vector.multi_reduction <add>, %6, %cst_5 [1] : vector<4x32xf32> to vector<4xf32>
    %8 = vector.shape_cast %7 : vector<4xf32> to vector<4x1xf32>
    %cst_6 = arith.constant 3.125000e-02 : f32
    %9 = vector.broadcast %cst_6 : f32 to vector<4x1xf32>
    %10 = arith.mulf %5, %9 : vector<4x1xf32>
    %11 = arith.mulf %5, %10 : vector<4x1xf32>
    %12 = arith.subf %8, %11 : vector<4x1xf32>
    %cst_7 = arith.constant 0.000000e+00 : f32
    %13 = vector.broadcast %cst_7 : f32 to vector<4x1xf32>
    %14 = arith.maximumf %12, %13 : vector<4x1xf32>
    %cst_8 = arith.constant 3.100000e+01 : f32
    %15 = vector.broadcast %cst_8 : f32 to vector<4x1xf32>
    %16 = arith.divf %14, %15 : vector<4x1xf32>
    %17 = math.sqrt %16 : vector<4x1xf32>
    %cst_9 = arith.constant 1.000000e-03 : f32
    %18 = vector.broadcast %cst_9 : f32 to vector<4x1xf32>
    %19 = arith.addf %17, %18 : vector<4x1xf32>
    %20 = tpu.reciprocal %19 : vector<4x1xf32> -> vector<4x1xf32>
    %21 = vector.broadcast %10 : vector<4x1xf32> to vector<4x32xf32>
    %22 = arith.subf %3, %21 : vector<4x32xf32>
    %23 = vector.broadcast %20 : vector<4x1xf32> to vector<4x32xf32>
    %24 = arith.mulf %22, %23 : vector<4x32xf32>
    %25 = vector.broadcast %1 : vector<1x32xf32> to vector<4x32xf32>
    %26 = arith.mulf %24, %25 : vector<4x32xf32>
    %27 = vector.broadcast %2 : vector<1x32xf32> to vector<4x32xf32>
    %28 = arith.addf %26, %27 : vector<4x32xf32>
    %c0_10 = arith.constant 0 : index
    %c0_11 = arith.constant 0 : index
    %29 = vector.load %arg4[%c0_10, %c0_11] : memref<4x128xf32, #tpu.memory_space<vmem>>, vector<4x32xf32>
    tpu.vector_store %arg4[%c0_10, %c0_11], %28 {strides = array<i32>} : memref<4x128xf32, #tpu.memory_space<vmem>>, vector<4x32xf32>,
    %30 = vector.extract_strided_slice %0 {offsets = [0, 32], sizes = [4, 32], strides = [1, 1]} : vector<4x128xf32> to vector<4x32xf32>
    %cst_12 = arith.constant dense<0.000000e+00> : vector<4xf32>
    %31 = vector.multi_reduction <add>, %30, %cst_12 [1] : vector<4x32xf32> to vector<4xf32>
    %32 = vector.shape_cast %31 : vector<4xf32> to vector<4x1xf32>
    %33 = arith.mulf %30, %30 : vector<4x32xf32>
    %cst_13 = arith.constant dense<0.000000e+00> : vector<4xf32>
    %34 = vector.multi_reduction <add>, %33, %cst_13 [1] : vector<4x32xf32> to vector<4xf32>
    %35 = vector.shape_cast %34 : vector<4xf32> to vector<4x1xf32>
    %cst_14 = arith.constant 3.125000e-02 : f32
    %36 = vector.broadcast %cst_14 : f32 to vector<4x1xf32>
    %37 = arith.mulf %32, %36 : vector<4x1xf32>
    %38 = arith.mulf %32, %37 : vector<4x1xf32>
    %39 = arith.subf %35, %38 : vector<4x1xf32>
    %cst_15 = arith.constant 0.000000e+00 : f32
    %40 = vector.broadcast %cst_15 : f32 to vector<4x1xf32>
    %41 = arith.maximumf %39, %40 : vector<4x1xf32>
    %cst_16 = arith.constant 3.100000e+01 : f32
    %42 = vector.broadcast %cst_16 : f32 to vector<4x1xf32>
    %43 = arith.divf %41, %42 : vector<4x1xf32>
    %44 = math.sqrt %43 : vector<4x1xf32>
    %cst_17 = arith.constant 1.000000e-03 : f32
    %45 = vector.broadcast %cst_17 : f32 to vector<4x1xf32>
    %46 = arith.addf %44, %45 : vector<4x1xf32>
    %47 = tpu.reciprocal %46 : vector<4x1xf32> -> vector<4x1xf32>
    %48 = vector.broadcast %37 : vector<4x1xf32> to vector<4x32xf32>
    %49 = arith.subf %30, %48 : vector<4x32xf32>
    %50 = vector.broadcast %47 : vector<4x1xf32> to vector<4x32xf32>
    %51 = arith.mulf %49, %50 : vector<4x32xf32>
    %52 = vector.broadcast %1 : vector<1x32xf32> to vector<4x32xf32>
    %53 = arith.mulf %51, %52 : vector<4x32xf32>
    %54 = vector.broadcast %2 : vector<1x32xf32> to vector<4x32xf32>
    %55 = arith.addf %53, %54 : vector<4x32xf32>
    %c0_18 = arith.constant 0 : index
    %c32 = arith.constant 32 : index
    %56 = vector.load %arg4[%c0_18, %c32] : memref<4x128xf32, #tpu.memory_space<vmem>>, vector<4x32xf32>
    tpu.vector_store %arg4[%c0_18, %c32], %55 {strides = array<i32>} : memref<4x128xf32, #tpu.memory_space<vmem>>, vector<4x32xf32>,
    %57 = vector.extract_strided_slice %0 {offsets = [0, 64], sizes = [4, 32], strides = [1, 1]} : vector<4x128xf32> to vector<4x32xf32>
    %cst_19 = arith.constant dense<0.000000e+00> : vector<4xf32>
    %58 = vector.multi_reduction <add>, %57, %cst_19 [1] : vector<4x32xf32> to vector<4xf32>
    %59 = vector.shape_cast %58 : vector<4xf32> to vector<4x1xf32>
    %60 = arith.mulf %57, %57 : vector<4x32xf32>
    %cst_20 = arith.constant dense<0.000000e+00> : vector<4xf32>
    %61 = vector.multi_reduction <add>, %60, %cst_20 [1] : vector<4x32xf32> to vector<4xf32>
    %62 = vector.shape_cast %61 : vector<4xf32> to vector<4x1xf32>
    %cst_21 = arith.constant 3.125000e-02 : f32
    %63 = vector.broadcast %cst_21 : f32 to vector<4x1xf32>
    %64 = arith.mulf %59, %63 : vector<4x1xf32>
    %65 = arith.mulf %59, %64 : vector<4x1xf32>
    %66 = arith.subf %62, %65 : vector<4x1xf32>
    %cst_22 = arith.constant 0.000000e+00 : f32
    %67 = vector.broadcast %cst_22 : f32 to vector<4x1xf32>
    %68 = arith.maximumf %66, %67 : vector<4x1xf32>
    %cst_23 = arith.constant 3.100000e+01 : f32
    %69 = vector.broadcast %cst_23 : f32 to vector<4x1xf32>
    %70 = arith.divf %68, %69 : vector<4x1xf32>
    %71 = math.sqrt %70 : vector<4x1xf32>
    %cst_24 = arith.constant 1.000000e-03 : f32
    %72 = vector.broadcast %cst_24 : f32 to vector<4x1xf32>
    %73 = arith.addf %71, %72 : vector<4x1xf32>
    %74 = tpu.reciprocal %73 : vector<4x1xf32> -> vector<4x1xf32>
    %75 = vector.broadcast %64 : vector<4x1xf32> to vector<4x32xf32>
    %76 = arith.subf %57, %75 : vector<4x32xf32>
    %77 = vector.broadcast %74 : vector<4x1xf32> to vector<4x32xf32>
    %78 = arith.mulf %76, %77 : vector<4x32xf32>
    %79 = vector.broadcast %1 : vector<1x32xf32> to vector<4x32xf32>
    %80 = arith.mulf %78, %79 : vector<4x32xf32>
    %81 = vector.broadcast %2 : vector<1x32xf32> to vector<4x32xf32>
    %82 = arith.addf %80, %81 : vector<4x32xf32>
    %c0_25 = arith.constant 0 : index
    %c64 = arith.constant 64 : index
    %83 = vector.load %arg4[%c0_25, %c64] : memref<4x128xf32, #tpu.memory_space<vmem>>, vector<4x32xf32>
    tpu.vector_store %arg4[%c0_25, %c64], %82 {strides = array<i32>} : memref<4x128xf32, #tpu.memory_space<vmem>>, vector<4x32xf32>,
    %84 = vector.extract_strided_slice %0 {offsets = [0, 96], sizes = [4, 32], strides = [1, 1]} : vector<4x128xf32> to vector<4x32xf32>
    %cst_26 = arith.constant dense<0.000000e+00> : vector<4xf32>
    %85 = vector.multi_reduction <add>, %84, %cst_26 [1] : vector<4x32xf32> to vector<4xf32>
    %86 = vector.shape_cast %85 : vector<4xf32> to vector<4x1xf32>
    %87 = arith.mulf %84, %84 : vector<4x32xf32>
    %cst_27 = arith.constant dense<0.000000e+00> : vector<4xf32>
    %88 = vector.multi_reduction <add>, %87, %cst_27 [1] : vector<4x32xf32> to vector<4xf32>
    %89 = vector.shape_cast %88 : vector<4xf32> to vector<4x1xf32>
    %cst_28 = arith.constant 3.125000e-02 : f32
    %90 = vector.broadcast %cst_28 : f32 to vector<4x1xf32>
    %91 = arith.mulf %86, %90 : vector<4x1xf32>
    %92 = arith.mulf %86, %91 : vector<4x1xf32>
    %93 = arith.subf %89, %92 : vector<4x1xf32>
    %cst_29 = arith.constant 0.000000e+00 : f32
    %94 = vector.broadcast %cst_29 : f32 to vector<4x1xf32>
    %95 = arith.maximumf %93, %94 : vector<4x1xf32>
    %cst_30 = arith.constant 3.100000e+01 : f32
    %96 = vector.broadcast %cst_30 : f32 to vector<4x1xf32>
    %97 = arith.divf %95, %96 : vector<4x1xf32>
    %98 = math.sqrt %97 : vector<4x1xf32>
    %cst_31 = arith.constant 1.000000e-03 : f32
    %99 = vector.broadcast %cst_31 : f32 to vector<4x1xf32>
    %100 = arith.addf %98, %99 : vector<4x1xf32>
    %101 = tpu.reciprocal %100 : vector<4x1xf32> -> vector<4x1xf32>
    %102 = vector.broadcast %91 : vector<4x1xf32> to vector<4x32xf32>
    %103 = arith.subf %84, %102 : vector<4x32xf32>
    %104 = vector.broadcast %101 : vector<4x1xf32> to vector<4x32xf32>
    %105 = arith.mulf %103, %104 : vector<4x32xf32>
    %106 = vector.broadcast %1 : vector<1x32xf32> to vector<4x32xf32>
    %107 = arith.mulf %105, %106 : vector<4x32xf32>
    %108 = vector.broadcast %2 : vector<1x32xf32> to vector<4x32xf32>
    %109 = arith.addf %107, %108 : vector<4x32xf32>
    %c0_32 = arith.constant 0 : index
    %c96 = arith.constant 96 : index
    %110 = vector.load %arg4[%c0_32, %c96] : memref<4x128xf32, #tpu.memory_space<vmem>>, vector<4x32xf32>
    tpu.vector_store %arg4[%c0_32, %c96], %109 {strides = array<i32>} : memref<4x128xf32, #tpu.memory_space<vmem>>, vector<4x32xf32>,
    return
  }
  func.func @transform_0(%arg0: i32) -> (i32, i32) {
    %c0_i32 = arith.constant 0 : i32
    %c0_i32_0 = arith.constant 0 : i32
    return %arg0, %c0_i32 : i32, i32
  }
  func.func @transform_1(%arg0: i32) -> (i32, i32) {
    %c0_i32 = arith.constant 0 : i32
    %c0_i32_0 = arith.constant 0 : i32
    %c0_i32_1 = arith.constant 0 : i32
    return %c0_i32, %c0_i32_0 : i32, i32
  }
  func.func @transform_2(%arg0: i32) -> (i32, i32) {
    %c0_i32 = arith.constant 0 : i32
    %c0_i32_0 = arith.constant 0 : i32
    %c0_i32_1 = arith.constant 0 : i32
    return %c0_i32, %c0_i32_0 : i32, i32
  }
  func.func @transform_3(%arg0: i32) -> (i32, i32) {
    %c0_i32 = arith.constant 0 : i32
    %c0_i32_0 = arith.constant 0 : i32
    return %arg0, %c0_i32 : i32, i32
  }
}

</mosaic_0001>

<llo_original>
// kernel: tpu_custom_call.1
$region0: #{tpu_custom_call.1}
  #allocation0 [shape = 'u32[]', space=smem, size = 0x4, offset = 0x4, fixed_abs, tag = 'smem constant byte address 0x4 - core index']
  #allocation1 [shape = 'u32[72,128]{1,0:T(1,128)}', space=vmem, size = 0x9000, scoped, tag = 'internal scratch']
  %s0 = inlined_call_operand.hbm [shape: f32[4,128], index: 0, kind: input, shape index: {}]
  %s1 = inlined_call_operand.hbm [shape: f32[1,32], index: 1, kind: input, shape index: {}]
  %s2 = inlined_call_operand.vmem [shape: f32[1,32], index: 2, kind: input, shape index: {}]
  %s3 = inlined_call_operand.hbm [shape: f32[4,128], index: 3, kind: output, shape index: {}]
  %s4 = sld [smem:[#allocation0]]
  $region30: #{tpu_custom_call.1} parent=0
    _
  %s6 = ssub.s32 1, %s4
  %s7 = scalar_select 0, %s6, %s4
  $region1: #{tpu_custom_call.1} parent=0
    #allocation2 [shape = 'u8[2048]{0}', space=vmem, size = 0x800, scoped, tag = 'input window, operand 0, single buffered']
    #allocation3 [shape = 's32[1]{0}', space=sflag, size = 0x4, scoped, tag = 'scoped memory for tpu_custom_call.1']
    #allocation4 [shape = 's32[1]{0}', space=sflag, size = 0x4, scoped, tag = 'scoped memory for tpu_custom_call.1']
    #allocation5 [shape = 'u8[512]{0}', space=vmem, size = 0x400, scoped, tag = 'input window, operand 1, single buffered']
    #allocation6 [shape = 's32[1]{0}', space=sflag, size = 0x4, scoped, tag = 'scoped memory for tpu_custom_call.1']
    #allocation7 [shape = 'u8[2048]{0}', space=vmem, size = 0x800, scoped, tag = 'output window, operand 0, single buffered']
    %8 = vsyncpa [#allocation3], 0
    %9 = vsyncpa [#allocation6], 0
    %10 = vsyncpa [#allocation4], 0
    // Predicated region
    $region2: #{tpu_custom_call.1} parent=1 // pred_check
      _
    $region3: #{tpu_custom_call.1} parent=1 // pred_check_branch
      %12 = sbr.rel (0) target = $region5
    $region4: #{tpu_custom_call.1} parent=1 // pred_region
      %14 = vsyncadd [#allocation3], 0
      %s16 = sshll.u32 %s0, 4
      %s17 = int_to_ptr.hbm [resolvable:$true] %s16
      %s18 = sshll.u32 [#allocation2], 4
      %s19 = int_to_ptr.vmem [resolvable:$true] %s18
      %21 = dma.hbm_to_vmem [thread:$0]  %s17, 64, %s19, [#allocation3]
    $region5: #{tpu_custom_call.1} parent=1 // pred_fallthru
      _
    // Predicated region
    $region6: #{tpu_custom_call.1} parent=1 // pred_check
      _
    $region7: #{tpu_custom_call.1} parent=1 // pred_check_branch
      %23 = sbr.rel (0) target = $region9
    $region8: #{tpu_custom_call.1} parent=1 // pred_region
      %25 = vsyncadd [#allocation6], 0
      %s27 = sshll.u32 %s1, 4
      %s28 = int_to_ptr.hbm [resolvable:$true] %s27
      %s29 = sshll.u32 [#allocation5], 4
      %s30 = int_to_ptr.vmem [resolvable:$true] %s29
      %32 = dma.hbm_to_vmem [thread:$0]  %s28, 16, %s30, [#allocation6]
    $region9: #{tpu_custom_call.1} parent=1 // pred_fallthru
      _
    // Predicated region
    $region10: #{tpu_custom_call.1} parent=1 // pred_check
      _
    $region11: #{tpu_custom_call.1} parent=1 // pred_check_branch
      %34 = sbr.rel (0) target = $region13
    $region12: #{tpu_custom_call.1} parent=1 // pred_region
      _
    $region13: #{tpu_custom_call.1} parent=1 // pred_fallthru
      _
    // Predicated region
    $region14: #{tpu_custom_call.1} parent=1 // pred_check
      _
    $region15: #{tpu_custom_call.1} parent=1 // pred_check_branch
      %36 = sbr.rel (0) target = $region17
    $region16: #{tpu_custom_call.1} parent=1 // pred_region
      %38 = dma.done [#allocation3], 64
    $region17: #{tpu_custom_call.1} parent=1 // pred_fallthru
      _
    // Predicated region
    $region18: #{tpu_custom_call.1} parent=1 // pred_check
      _
    $region19: #{tpu_custom_call.1} parent=1 // pred_check_branch
      %40 = sbr.rel (0) target = $region21
    $region20: #{tpu_custom_call.1} parent=1 // pred_region
      %42 = dma.done [#allocation6], 16
    $region21: #{tpu_custom_call.1} parent=1 // pred_fallthru
      _
    %v43 = vld [vmem:[#allocation2] sm:$0xf]
    %v44 = vld [vmem:[#allocation5] sm:$0x1]
    %v45 = vld [vmem:[%s2] sm:$0x1]
    %vm46 = vcmask 257024
    %v47 = vsel %vm46, %v43, 0.0
    %48 = vadd.xlane.f32.xlu0 %v47
    %v49 = vpop.xlane.xlu0 %48
    %v50 = vmul.f32 %v43, %v43
    %v51 = vsel %vm46, %v50, 0.0
    %52 = vadd.xlane.f32.xlu0 %v51
    %v53 = vpop.xlane.xlu0 %52
    %v54 = vmul.f32 %v49, 0.03125
    %v55 = vmul.f32 %v49, %v54
    %v56 = vsub.f32 %v53, %v55
    %v57 = vmax.f32 %v56, 0.0
    %v58 = vrcp.pop 31.0
    %v59 = vmul.f32 31.0, %v58
    %v60 = vsub.f32 1.0, %v59
    %v61 = vmul.f32 %v58, %v60
    %v62 = vadd.f32 %v58, %v61
    %vm63 = vweird.f32 %v58
    %v64 = vsel %vm63, %v58, %v62
    %v65 = vmul.f32 %v57, %v64
    %v66 = vrsqrt.pop %v65
    %v67 = vmul.f32 %v66, %v65
    %v68 = vmul.f32 %v67, %v66
    %v69 = vmul.f32 0.5, %v68
    %v70 = vsub.f32 1.5, %v69
    %v71 = vmul.f32 %v66, %v70
    %v72 = vmul.f32 %v65, %v71
    %vm73 = vcmp.eq.f32.partialorder %v65, inf
    %v74 = vsel %vm73, %v65, %v72
    %vm75 = vcmp.eq.f32.partialorder %v65, 0.0
    %v76 = vand.u32 %v65, 2147483648
    %v77 = vsel %vm75, %v76, %v74
    %v78 = vadd.f32 %v77, 0.001
    %v79 = vrcp.pop %v78
    %v80 = vmul.f32 %v78, %v79
    %v81 = vsub.f32 1.0, %v80
    %v82 = vmul.f32 %v79, %v81
    %v83 = vadd.f32 %v79, %v82
    %vm84 = vweird.f32 %v78
    %vm85 = vweird.f32 %v79
    %vm86 = vmor %vm84, %vm85
    %v87 = vsel %vm86, %v79, %v83
    %v88 = vand.u32 2147483647, %v78
    %vm89 = vcmp.eq.f32.partialorder %v88, 8.507059e+37
    %v90 = vand.u32 %v78, 2147483648
    %v91 = vor.u32 1.1754944e-38, %v90
    %v92 = vsel %vm89, %v91, %v87
    %v93 = vsub.f32 %v43, %v54
    %v94 = vmul.f32 %v93, %v92
    %v96 = vperm.slane %v44, 0
    %v98 = vmul.f32 %v94, %v96
    %v100 = vperm.slane %v45, 0
    %v102 = vadd.f32 %v98, %v100
    %103 = vst.msk [vmem:[#allocation7] sm:$0xf] %vm46, %v102
    %105 = vrot.lane.b32.xlu0 %v43, 96
    %v106 = vpop.permute.xlu0 %105
    %v108 = vsel %vm46, %v106, 0.0
    %109 = vadd.xlane.f32.xlu0 %v108
    %v110 = vpop.xlane.xlu0 %109
    %112 = vrot.lane.b32.xlu0 %v50, 96
    %v113 = vpop.permute.xlu0 %112
    %v115 = vsel %vm46, %v113, 0.0
    %116 = vadd.xlane.f32.xlu0 %v115
    %v117 = vpop.xlane.xlu0 %116
    %v118 = vmul.f32 %v110, 0.03125
    %v119 = vmul.f32 %v110, %v118
    %v120 = vsub.f32 %v117, %v119
    %v121 = vmax.f32 %v120, 0.0
    %v122 = vmul.f32 %v121, %v64
    %v123 = vrsqrt.pop %v122
    %v124 = vmul.f32 %v123, %v122
    %v125 = vmul.f32 %v124, %v123
    %v126 = vmul.f32 0.5, %v125
    %v127 = vsub.f32 1.5, %v126
    %v128 = vmul.f32 %v123, %v127
    %v129 = vmul.f32 %v122, %v128
    %vm130 = vcmp.eq.f32.partialorder %v122, inf
    %v131 = vsel %vm130, %v122, %v129
    %vm132 = vcmp.eq.f32.partialorder %v122, 0.0
    %v133 = vand.u32 %v122, 2147483648
    %v134 = vsel %vm132, %v133, %v131
    %v135 = vadd.f32 %v134, 0.001
    %v136 = vrcp.pop %v135
    %v137 = vmul.f32 %v135, %v136
    %v138 = vsub.f32 1.0, %v137
    %v139 = vmul.f32 %v136, %v138
    %v140 = vadd.f32 %v136, %v139
    %vm141 = vweird.f32 %v135
    %vm142 = vweird.f32 %v136
    %vm143 = vmor %vm141, %vm142
    %v144 = vsel %vm143, %v136, %v140
    %v145 = vand.u32 2147483647, %v135
    %vm146 = vcmp.eq.f32.partialorder %v145, 8.507059e+37
    %v147 = vand.u32 %v135, 2147483648
    %v148 = vor.u32 1.1754944e-38, %v147
    %v149 = vsel %vm146, %v148, %v144
    %v150 = vsub.f32 %v43, %v118
    %v151 = vmul.f32 %v150, %v149
    %152 = vrot.lane.b32.xlu0 %v96, 32
    %v153 = vpop.permute.xlu0 %152
    %v155 = vmul.f32 %v151, %v153
    %156 = vrot.lane.b32.xlu0 %v100, 32
    %v157 = vpop.permute.xlu0 %156
    %v159 = vadd.f32 %v155, %v157
    %vm160 = vcmask 519424
    %161 = vst.msk [vmem:[#allocation7] sm:$0xf] %vm160, %v159
    %162 = vrot.lane.b32.xlu0 %v43, 64
    %v163 = vpop.permute.xlu0 %162
    %v165 = vsel %vm46, %v163, 0.0
    %166 = vadd.xlane.f32.xlu0 %v165
    %v167 = vpop.xlane.xlu0 %166
    %168 = vrot.lane.b32.xlu0 %v50, 64
    %v169 = vpop.permute.xlu0 %168
    %v171 = vsel %vm46, %v169, 0.0
    %172 = vadd.xlane.f32.xlu0 %v171
    %v173 = vpop.xlane.xlu0 %172
    %v174 = vmul.f32 %v167, 0.03125
    %v175 = vmul.f32 %v167, %v174
    %v176 = vsub.f32 %v173, %v175
    %v177 = vmax.f32 %v176, 0.0
    %v178 = vmul.f32 %v177, %v64
    %v179 = vrsqrt.pop %v178
    %v180 = vmul.f32 %v179, %v178
    %v181 = vmul.f32 %v180, %v179
    %v182 = vmul.f32 0.5, %v181
    %v183 = vsub.f32 1.5, %v182
    %v184 = vmul.f32 %v179, %v183
    %v185 = vmul.f32 %v178, %v184
    %vm186 = vcmp.eq.f32.partialorder %v178, inf
    %v187 = vsel %vm186, %v178, %v185
    %vm188 = vcmp.eq.f32.partialorder %v178, 0.0
    %v189 = vand.u32 %v178, 2147483648
    %v190 = vsel %vm188, %v189, %v187
    %v191 = vadd.f32 %v190, 0.001
    %v192 = vrcp.pop %v191
    %v193 = vmul.f32 %v191, %v192
    %v194 = vsub.f32 1.0, %v193
    %v195 = vmul.f32 %v192, %v194
    %v196 = vadd.f32 %v192, %v195
    %vm197 = vweird.f32 %v191
    %vm198 = vweird.f32 %v192
    %vm199 = vmor %vm197, %vm198
    %v200 = vsel %vm199, %v192, %v196
    %v201 = vand.u32 2147483647, %v191
    %vm202 = vcmp.eq.f32.partialorder %v201, 8.507059e+37
    %v203 = vand.u32 %v191, 2147483648
    %v204 = vor.u32 1.1754944e-38, %v203
    %v205 = vsel %vm202, %v204, %v200
    %v206 = vsub.f32 %v43, %v174
    %v207 = vmul.f32 %v206, %v205
    %208 = vrot.lane.b32.xlu0 %v96, 64
    %v209 = vpop.permute.xlu0 %208
    %v211 = vmul.f32 %v207, %v209
    %212 = vrot.lane.b32.xlu0 %v100, 64
    %v213 = vpop.permute.xlu0 %212
    %v215 = vadd.f32 %v211, %v213
    %vm216 = vcmask 781824
    %217 = vst.msk [vmem:[#allocation7] sm:$0xf] %vm216, %v215
    %218 = vrot.lane.b32.xlu0 %v43, 32
    %v219 = vpop.permute.xlu0 %218
    %v221 = vsel %vm46, %v219, 0.0
    %222 = vadd.xlane.f32.xlu0 %v221
    %v223 = vpop.xlane.xlu0 %222
    %224 = vrot.lane.b32.xlu0 %v50, 32
    %v225 = vpop.permute.xlu0 %224
    %v227 = vsel %vm46, %v225, 0.0
    %228 = vadd.xlane.f32.xlu0 %v227
    %v229 = vpop.xlane.xlu0 %228
    %v230 = vmul.f32 %v223, 0.03125
    %v231 = vmul.f32 %v223, %v230
    %v232 = vsub.f32 %v229, %v231
    %v233 = vmax.f32 %v232, 0.0
    %v234 = vmul.f32 %v233, %v64
    %v235 = vrsqrt.pop %v234
    %v236 = vmul.f32 %v235, %v234
    %v237 = vmul.f32 %v236, %v235
    %v238 = vmul.f32 0.5, %v237
    %v239 = vsub.f32 1.5, %v238
    %v240 = vmul.f32 %v235, %v239
    %v241 = vmul.f32 %v234, %v240
    %vm242 = vcmp.eq.f32.partialorder %v234, inf
    %v243 = vsel %vm242, %v234, %v241
    %vm244 = vcmp.eq.f32.partialorder %v234, 0.0
    %v245 = vand.u32 %v234, 2147483648
    %v246 = vsel %vm244, %v245, %v243
    %v247 = vadd.f32 %v246, 0.001
    %v248 = vrcp.pop %v247
    %v249 = vmul.f32 %v247, %v248
    %v250 = vsub.f32 1.0, %v249
    %v251 = vmul.f32 %v248, %v250
    %v252 = vadd.f32 %v248, %v251
    %vm253 = vweird.f32 %v247
    %vm254 = vweird.f32 %v248
    %vm255 = vmor %vm253, %vm254
    %v256 = vsel %vm255, %v248, %v252
    %v257 = vand.u32 2147483647, %v247
    %vm258 = vcmp.eq.f32.partialorder %v257, 8.507059e+37
    %v259 = vand.u32 %v247, 2147483648
    %v260 = vor.u32 1.1754944e-38, %v259
    %v261 = vsel %vm258, %v260, %v256
    %v262 = vsub.f32 %v43, %v230
    %v263 = vmul.f32 %v262, %v261
    %264 = vrot.lane.b32.xlu0 %v96, 96
    %v265 = vpop.permute.xlu0 %264
    %v267 = vmul.f32 %v263, %v265
    %268 = vrot.lane.b32.xlu0 %v100, 96
    %v269 = vpop.permute.xlu0 %268
    %v271 = vadd.f32 %v267, %v269
    %vm272 = vcmask 1044224
    %273 = vst.msk [vmem:[#allocation7] sm:$0xf] %vm272, %v271
    // Predicated region
    $region22: #{tpu_custom_call.1} parent=1 // pred_check
      _
    $region23: #{tpu_custom_call.1} parent=1 // pred_check_branch
      %275 = sbr.rel (0) target = $region25
    $region24: #{tpu_custom_call.1} parent=1 // pred_region
      %277 = vsyncadd [#allocation4], 0
      %s279 = sshll.u32 [#allocation7], 4
      %s280 = int_to_ptr.vmem [resolvable:$true] %s279
      %s281 = sshll.u32 %s3, 4
      %s282 = int_to_ptr.hbm [resolvable:$true] %s281
      %284 = dma.vmem_to_hbm [thread:$0]  %s280, 64, %s282, [#allocation4]
    $region25: #{tpu_custom_call.1} parent=1 // pred_fallthru
      _
    // Predicated region
    $region26: #{tpu_custom_call.1} parent=1 // pred_check
      _
    $region27: #{tpu_custom_call.1} parent=1 // pred_check_branch
      %286 = sbr.rel (0) target = $region29
    $region28: #{tpu_custom_call.1} parent=1 // pred_region
      %288 = dma.done [#allocation4], 64
    $region29: #{tpu_custom_call.1} parent=1 // pred_fallthru
      _
    %289 = vsyncpa [#allocation3], 1
    %290 = vsyncpa [#allocation6], 1
    %291 = vsyncpa [#allocation4], 1

</llo_original>
